<compile_context>
chip_gen: v7x
topology: tpu7x:2x2x1
jax: 0.10.0
libtpu: 0.0.40
codegen_flags: <defaults>
</compile_context>

<pallas_src>
import jax
import jax.numpy as jnp
from jax.experimental import pallas as pl
from jax.experimental.pallas import tpu as pltpu
from functools import partial


# ---------------------------------------------------------------------------
# Backward Pallas kernel: o = (-lambda) * g,  lambda read from SMEM
# ---------------------------------------------------------------------------
def _neg_scale_kernel(g_ref, lam_ref, o_ref):
    neg_lam = -lam_ref[0]                       # f32 scalar from SMEM (sreg)
    # bf16 grads promote to f32 for the multiply, cast back on store.
    o_ref[...] = (g_ref[...] * neg_lam).astype(o_ref.dtype)


# ---------------------------------------------------------------------------
# Backward wrapper
# ---------------------------------------------------------------------------
_LANE_COLS = 1024                 # lane-dense slab width: 8 sublanes * 128 lanes
_MIN_PALLAS_ELEMS = 4 * 1024 * 1024   # auto-path threshold (XLA fusion wins below)
_TILE_BYTES = 8 * 1024 * 1024     # ~8 MiB tiles (v7x step-overhead amortization)
_VMEM_LIMIT_BYTES = 48 * 1024 * 1024  # 2 in + 2 out buffers (32 MiB) + headroom


def _sublane_multiple(dtype):
    # rows multiple of 8 (f32), 16 (bf16), 32 (int8/fp8) keeps vregs packed
    itemsize = jnp.dtype(dtype).itemsize
    return max(8, 32 // itemsize)


def _neg_scale(g, lambda_val, use_pallas):
    """grad_input = -lambda_val * grad_output."""
    lam = jnp.asarray(lambda_val, jnp.float32)
    total = g.size
    sub = _sublane_multiple(g.dtype)

    eligible = (
        total > 0
        and total % _LANE_COLS == 0
        and (total // _LANE_COLS) % sub == 0
    )
    if use_pallas is None:                     # auto: Pallas only for huge grads
        use_pallas = eligible and total >= _MIN_PALLAS_ELEMS

    if not (use_pallas and eligible):
        # Default / fallback: let XLA fuse -lambda*g into adjacent backward ops
        # (no standalone HBM read+write) — usually the fastest option.
        return (g * (-lam)).astype(g.dtype)

    rows = total // _LANE_COLS
    g2d = g.reshape(rows, _LANE_COLS)
    itemsize = jnp.dtype(g.dtype).itemsize

    # ~8 MiB row tiles, rounded to the dtype's sublane multiple.
    max_tile_rows = max(sub, _TILE_BYTES // (_LANE_COLS * itemsize))
    tile_rows = min(rows, max_tile_rows)
    tile_rows = max(sub, (tile_rows // sub) * sub)
    grid = (pl.cdiv(rows, tile_rows),)

    lam1 = lam.reshape(1)                       # (1,) f32 scalar -> SMEM

    out = pl.pallas_call(
        _neg_scale_kernel,
        out_shape=jax.ShapeDtypeStruct((rows, _LANE_COLS), g.dtype),
        grid=grid,
        in_specs=[
            pl.BlockSpec((tile_rows, _LANE_COLS), lambda i: (i, 0)),
            pl.BlockSpec(memory_space=pltpu.MemorySpace.SMEM),   # lambda scalar
        ],
        out_specs=pl.BlockSpec((tile_rows, _LANE_COLS), lambda i: (i, 0)),
        input_output_aliases={0: 0},            # write back into g's buffer
        cost_estimate=pl.CostEstimate(
            flops=total,
            transcendentals=0,
            bytes_accessed=2 * total * itemsize,
        ),
        compiler_params=pltpu.CompilerParams(
            dimension_semantics=("parallel",),   # megacore sharding on v7x
            vmem_limit_bytes=_VMEM_LIMIT_BYTES,  # v5e default (16 MiB) too small
        ),
    )(g2d, lam1)
    return out.reshape(g.shape)


# ---------------------------------------------------------------------------
# Gradient reversal: identity forward, -lambda * grad backward
# ---------------------------------------------------------------------------
@partial(jax.custom_vjp, nondiff_argnums=(2,))
def gradient_reversal(x, lambda_val, use_pallas=None):
    return x  # forward is view_as(x): pure identity, no data movement


def _grl_fwd(x, lambda_val, use_pallas):
    return x, jnp.asarray(lambda_val, jnp.float32)


def _grl_bwd(use_pallas, lam, g):
    # PyTorch returns None for lambda's grad; the JAX equivalent is zeros.
    return (_neg_scale(g, lam, use_pallas), jnp.zeros_like(lam))


gradient_reversal.defvjp(_grl_fwd, _grl_bwd)


class GradientReversalLayer:
    """JAX/Pallas port of the PyTorch GradientReversalLayer (no parameters).

    `lambda_val` may be reassigned every step (DANN annealing) without
    triggering a Pallas recompile — it is a traced scalar operand.
    `use_pallas`: None = auto (XLA fusion unless the gradient is huge),
    True = force the Pallas kernel when the shape allows, False = always XLA.
    """

    def __init__(self, lambda_val=1.0, use_pallas=None):
        self.lambda_val = lambda_val
        self.use_pallas = use_pallas

    def __call__(self, x):
        lam = jnp.asarray(self.lambda_val, dtype=jnp.float32)
        return gradient_reversal(x, lam, self.use_pallas)


# ---------------------------------------------------------------------------
# Demo
# ---------------------------------------------------------------------------
if __name__ == "__main__":
    key = jax.random.PRNGKey(0)
    k_small, k_big = jax.random.split(key)

    # --- small NCHW input matching the original module usage (XLA path) ----
    x_small = jax.random.normal(k_small, (2, 4, 16, 16), dtype=jnp.float32)
    layer = GradientReversalLayer(lambda_val=1.0)

    y = jax.block_until_ready(layer(x_small))
    assert y.shape == x_small.shape and y.dtype == x_small.dtype
    assert bool(jnp.allclose(y, x_small)), "forward must be identity"

    grads = jax.grad(lambda v: jnp.sum(layer(v)))(x_small)
    grads = jax.block_until_ready(grads)
    assert bool(jnp.allclose(grads, -1.0 * jnp.ones_like(x_small))), \
        "backward must be -lambda (small/XLA path)"

    # --- lane-dense input: force & exercise the Pallas backward kernel -----
    x_big = jax.random.normal(k_big, (4, 16, 32, 32), dtype=jnp.float32)
    layer2 = GradientReversalLayer(lambda_val=0.7, use_pallas=True)

    y_big = jax.block_until_ready(layer2(x_big))
    assert bool(jnp.allclose(y_big, x_big)), "forward must be identity"

    grads_big = jax.grad(lambda v: jnp.sum(layer2(v)))(x_big)
    grads_big = jax.block_until_ready(grads_big)
    assert bool(jnp.allclose(grads_big, -0.7 * jnp.ones_like(x_big),
                             atol=1e-6)), "backward must be -lambda (Pallas path)"

    # --- lambda annealing: one compiled kernel, two lambda values ----------
    grad_fn = jax.jit(jax.grad(
        lambda v, lam: jnp.sum(gradient_reversal(v, lam, True))))
    g_a = jax.block_until_ready(grad_fn(x_big, jnp.float32(0.7)))
    g_b = jax.block_until_ready(grad_fn(x_big, jnp.float32(0.3)))
    assert bool(jnp.allclose(g_a, -0.7 * jnp.ones_like(x_big), atol=1e-6))
    assert bool(jnp.allclose(g_b, -0.3 * jnp.ones_like(x_big), atol=1e-6)), \
        "annealed lambda must be honored without recompiling"

    print("KERNEL_OK")
</pallas_src>

<mosaic_0001>
module attributes {stable_mosaic.version = 11 : i64} {
  func.func @_neg_scale_kernel(%arg0: i32, %arg1: memref<64x1024xf32, #tpu.memory_space<vmem>>, %arg2: memref<1xf32, #tpu.memory_space<smem>>, %arg3: memref<64x1024xf32, #tpu.memory_space<vmem>>) attributes {dimension_semantics = [#tpu.dimension_semantics<parallel>], iteration_bounds = array<i64: 1>, scalar_prefetch = 0 : i64, scratch_operands = 0 : i64, tpu.core_type = #tpu.core_type<tc>, window_params = [{transform_indices = @transform_0, window_bounds = array<i64: 64, 1024>}, {transform_indices = @transform_1, window_bounds = array<i64: 1>}, {transform_indices = @transform_2, window_bounds = array<i64: 64, 1024>}]} {
    %c0 = arith.constant 0 : index
    %0 = memref.load %arg2[%c0] : memref<1xf32, #tpu.memory_space<smem>>
    %cst = arith.constant 0.000000e+00 : f32
    %1 = arith.subf %cst, %0 : f32
    %c0_0 = arith.constant 0 : index
    %c0_1 = arith.constant 0 : index
    %2 = vector.load %arg1[%c0_0, %c0_1] : memref<64x1024xf32, #tpu.memory_space<vmem>>, vector<64x1024xf32>
    %3 = vector.broadcast %1 : f32 to vector<64x1024xf32>
    %4 = arith.mulf %2, %3 : vector<64x1024xf32>
    %c0_2 = arith.constant 0 : index
    %c0_3 = arith.constant 0 : index
    %5 = vector.load %arg3[%c0_2, %c0_3] : memref<64x1024xf32, #tpu.memory_space<vmem>>, vector<64x1024xf32>
    tpu.vector_store %arg3[%c0_2, %c0_3], %4 {strides = array<i32>} : memref<64x1024xf32, #tpu.memory_space<vmem>>, vector<64x1024xf32>,
    return
  }
  func.func @transform_0(%arg0: i32) -> (i32, i32) {
    %c0_i32 = arith.constant 0 : i32
    %c0_i32_0 = arith.constant 0 : i32
    return %arg0, %c0_i32 : i32, i32
  }
  func.func @transform_1(%arg0: i32) -> i32 {
    %c0_i32 = arith.constant 0 : i32
    %c0_i32_0 = arith.constant 0 : i32
    return %c0_i32 : i32
  }
  func.func @transform_2(%arg0: i32) -> (i32, i32) {
    %c0_i32 = arith.constant 0 : i32
    %c0_i32_0 = arith.constant 0 : i32
    return %arg0, %c0_i32 : i32, i32
  }
}

</mosaic_0001>

<llo_original>
// kernel: tpu_custom_call.1
$region0: #{tpu_custom_call.1}
  #allocation0 [shape = 'u32[]', space=smem, size = 0x4, offset = 0x4, fixed_abs, tag = 'smem constant byte address 0x4 - core index']
  #allocation1 [shape = 'u32[144,128]{1,0:T(1,128)}', space=vmem, size = 0x12000, scoped, tag = 'internal scratch']
  #allocation2 [shape = 'f32[1]{0:T(128)S(6)}', space=smem, size = 0x200, scoped, tag = 'scoped memory for tpu_custom_call.1']
  %s0 = inlined_call_operand.hbm [shape: f32[64,1024], index: 0, kind: input, shape index: {}, may-alias: {0,2}]
  %s1 = inlined_call_operand.<no memory space> [shape: f32[1], index: 1, kind: input, shape index: {}]
  %s2 = inlined_call_operand.hbm [shape: f32[64,1024], index: 2, kind: output, shape index: {}, may-alias: {0,2}]
  %s3 = sld [smem:[#allocation0]]
  $region22: #{tpu_custom_call.1} parent=0
    _
  %s5 = ssub.s32 1, %s3
  %s6 = scalar_select 0, %s5, %s3
  %7 = sst [smem:[#allocation2]] %s1
  $region1: #{tpu_custom_call.1} parent=0
    #allocation3 [shape = 'u8[262144]{0}', space=vmem, size = 0x40000, scoped, tag = 'input window, operand 0, single buffered']
    #allocation4 [shape = 's32[1]{0}', space=sflag, size = 0x4, scoped, tag = 'scoped memory for tpu_custom_call.1']
    #allocation5 [shape = 's32[1]{0}', space=sflag, size = 0x4, scoped, tag = 'scoped memory for tpu_custom_call.1']
    #allocation6 [shape = 'u8[262144]{0}', space=vmem, size = 0x40000, scoped, tag = 'output window, operand 0, single buffered']
    %8 = vsyncpa [#allocation4], 0
    %9 = vsyncpa [#allocation5], 0
    // Predicated region
    $region2: #{tpu_custom_call.1} parent=1 // pred_check
      _
    $region3: #{tpu_custom_call.1} parent=1 // pred_check_branch
      %11 = sbr.rel (0) target = $region5
    $region4: #{tpu_custom_call.1} parent=1 // pred_region
      %s13 = ssub.s32 8192, 8192
      %14 = vsyncadd [#allocation4], %s13
      %s15 = sshll.u32 [#allocation3], 4
      %s16 = int_to_ptr.vmem [resolvable:$true] %s15
      %21 = dma.hbm_to_vmem [thread:$0]  %s0, 8192, %s16, [#allocation4], 1024, 1024, 64
    $region5: #{tpu_custom_call.1} parent=1 // pred_fallthru
      _
    // Predicated region
    $region6: #{tpu_custom_call.1} parent=1 // pred_check
      _
    $region7: #{tpu_custom_call.1} parent=1 // pred_check_branch
      %23 = sbr.rel (0) target = $region9
    $region8: #{tpu_custom_call.1} parent=1 // pred_region
      _
    $region9: #{tpu_custom_call.1} parent=1 // pred_fallthru
      _
    // Predicated region
    $region10: #{tpu_custom_call.1} parent=1 // pred_check
      _
    $region11: #{tpu_custom_call.1} parent=1 // pred_check_branch
      %25 = sbr.rel (0) target = $region13
    $region12: #{tpu_custom_call.1} parent=1 // pred_region
      %26 = dma.done [#allocation4], 8192
    $region13: #{tpu_custom_call.1} parent=1 // pred_fallthru
      _
    %s27 = sld [smem:[#allocation2]]
    %s28 = ssub.f32 0.0, %s27
    %v29 = vld [vmem:[#allocation3] sm:$0xff]
    %v30 = vld [vmem:[#allocation3 + $0x8] sm:$0xff]
    %v31 = vld [vmem:[#allocation3 + $0x10] sm:$0xff]
    %v32 = vld [vmem:[#allocation3 + $0x18] sm:$0xff]
    %v33 = vld [vmem:[#allocation3 + $0x20] sm:$0xff]
    %v34 = vld [vmem:[#allocation3 + $0x28] sm:$0xff]
    %v35 = vld [vmem:[#allocation3 + $0x30] sm:$0xff]
    %v36 = vld [vmem:[#allocation3 + $0x38] sm:$0xff]
    %v37 = vld [vmem:[#allocation3 + $0x40] sm:$0xff]
    %v38 = vld [vmem:[#allocation3 + $0x48] sm:$0xff]
    %v39 = vld [vmem:[#allocation3 + $0x50] sm:$0xff]
    %v40 = vld [vmem:[#allocation3 + $0x58] sm:$0xff]
    %v41 = vld [vmem:[#allocation3 + $0x60] sm:$0xff]
    %v42 = vld [vmem:[#allocation3 + $0x68] sm:$0xff]
    %v43 = vld [vmem:[#allocation3 + $0x70] sm:$0xff]
    %v44 = vld [vmem:[#allocation3 + $0x78] sm:$0xff]
    %v45 = vld [vmem:[#allocation3 + $0x80] sm:$0xff]
    %v46 = vld [vmem:[#allocation3 + $0x88] sm:$0xff]
    %v47 = vld [vmem:[#allocation3 + $0x90] sm:$0xff]
    %v48 = vld [vmem:[#allocation3 + $0x98] sm:$0xff]
    %v49 = vld [vmem:[#allocation3 + $0xa0] sm:$0xff]
    %v50 = vld [vmem:[#allocation3 + $0xa8] sm:$0xff]
    %v51 = vld [vmem:[#allocation3 + $0xb0] sm:$0xff]
    %v52 = vld [vmem:[#allocation3 + $0xb8] sm:$0xff]
    %v53 = vld [vmem:[#allocation3 + $0xc0] sm:$0xff]
    %v54 = vld [vmem:[#allocation3 + $0xc8] sm:$0xff]
    %v55 = vld [vmem:[#allocation3 + $0xd0] sm:$0xff]
    %v56 = vld [vmem:[#allocation3 + $0xd8] sm:$0xff]
    %v57 = vld [vmem:[#allocation3 + $0xe0] sm:$0xff]
    %v58 = vld [vmem:[#allocation3 + $0xe8] sm:$0xff]
    %v59 = vld [vmem:[#allocation3 + $0xf0] sm:$0xff]
    %v60 = vld [vmem:[#allocation3 + $0xf8] sm:$0xff]
    %v61 = vld [vmem:[#allocation3 + $0x100] sm:$0xff]
    %v62 = vld [vmem:[#allocation3 + $0x108] sm:$0xff]
    %v63 = vld [vmem:[#allocation3 + $0x110] sm:$0xff]
    %v64 = vld [vmem:[#allocation3 + $0x118] sm:$0xff]
    %v65 = vld [vmem:[#allocation3 + $0x120] sm:$0xff]
    %v66 = vld [vmem:[#allocation3 + $0x128] sm:$0xff]
    %v67 = vld [vmem:[#allocation3 + $0x130] sm:$0xff]
    %v68 = vld [vmem:[#allocation3 + $0x138] sm:$0xff]
    %v69 = vld [vmem:[#allocation3 + $0x140] sm:$0xff]
    %v70 = vld [vmem:[#allocation3 + $0x148] sm:$0xff]
    %v71 = vld [vmem:[#allocation3 + $0x150] sm:$0xff]
    %v72 = vld [vmem:[#allocation3 + $0x158] sm:$0xff]
    %v73 = vld [vmem:[#allocation3 + $0x160] sm:$0xff]
    %v74 = vld [vmem:[#allocation3 + $0x168] sm:$0xff]
    %v75 = vld [vmem:[#allocation3 + $0x170] sm:$0xff]
    %v76 = vld [vmem:[#allocation3 + $0x178] sm:$0xff]
    %v77 = vld [vmem:[#allocation3 + $0x180] sm:$0xff]
    %v78 = vld [vmem:[#allocation3 + $0x188] sm:$0xff]
    %v79 = vld [vmem:[#allocation3 + $0x190] sm:$0xff]
    %v80 = vld [vmem:[#allocation3 + $0x198] sm:$0xff]
    %v81 = vld [vmem:[#allocation3 + $0x1a0] sm:$0xff]
    %v82 = vld [vmem:[#allocation3 + $0x1a8] sm:$0xff]
    %v83 = vld [vmem:[#allocation3 + $0x1b0] sm:$0xff]
    %v84 = vld [vmem:[#allocation3 + $0x1b8] sm:$0xff]
    %v85 = vld [vmem:[#allocation3 + $0x1c0] sm:$0xff]
    %v86 = vld [vmem:[#allocation3 + $0x1c8] sm:$0xff]
    %v87 = vld [vmem:[#allocation3 + $0x1d0] sm:$0xff]
    %v88 = vld [vmem:[#allocation3 + $0x1d8] sm:$0xff]
    %v89 = vld [vmem:[#allocation3 + $0x1e0] sm:$0xff]
    %v90 = vld [vmem:[#allocation3 + $0x1e8] sm:$0xff]
    %v91 = vld [vmem:[#allocation3 + $0x1f0] sm:$0xff]
    %v92 = vld [vmem:[#allocation3 + $0x1f8] sm:$0xff]
    %v93 = vstv %s28
    %v94 = vmul.f32 %v29, %v93
    %v95 = vmul.f32 %v30, %v93
    %v96 = vmul.f32 %v31, %v93
    %v97 = vmul.f32 %v32, %v93
    %v98 = vmul.f32 %v33, %v93
    %v99 = vmul.f32 %v34, %v93
    %v100 = vmul.f32 %v35, %v93
    %v101 = vmul.f32 %v36, %v93
    %v102 = vmul.f32 %v37, %v93
    %v103 = vmul.f32 %v38, %v93
    %v104 = vmul.f32 %v39, %v93
    %v105 = vmul.f32 %v40, %v93
    %v106 = vmul.f32 %v41, %v93
    %v107 = vmul.f32 %v42, %v93
    %v108 = vmul.f32 %v43, %v93
    %v109 = vmul.f32 %v44, %v93
    %v110 = vmul.f32 %v45, %v93
    %v111 = vmul.f32 %v46, %v93
    %v112 = vmul.f32 %v47, %v93
    %v113 = vmul.f32 %v48, %v93
    %v114 = vmul.f32 %v49, %v93
    %v115 = vmul.f32 %v50, %v93
    %v116 = vmul.f32 %v51, %v93
    %v117 = vmul.f32 %v52, %v93
    %v118 = vmul.f32 %v53, %v93
    %v119 = vmul.f32 %v54, %v93
    %v120 = vmul.f32 %v55, %v93
    %v121 = vmul.f32 %v56, %v93
    %v122 = vmul.f32 %v57, %v93
    %v123 = vmul.f32 %v58, %v93
    %v124 = vmul.f32 %v59, %v93
    %v125 = vmul.f32 %v60, %v93
    %v126 = vmul.f32 %v61, %v93
    %v127 = vmul.f32 %v62, %v93
    %v128 = vmul.f32 %v63, %v93
    %v129 = vmul.f32 %v64, %v93
    %v130 = vmul.f32 %v65, %v93
    %v131 = vmul.f32 %v66, %v93
    %v132 = vmul.f32 %v67, %v93
    %v133 = vmul.f32 %v68, %v93
    %v134 = vmul.f32 %v69, %v93
    %v135 = vmul.f32 %v70, %v93
    %v136 = vmul.f32 %v71, %v93
    %v137 = vmul.f32 %v72, %v93
    %v138 = vmul.f32 %v73, %v93
    %v139 = vmul.f32 %v74, %v93
    %v140 = vmul.f32 %v75, %v93
    %v141 = vmul.f32 %v76, %v93
    %v142 = vmul.f32 %v77, %v93
    %v143 = vmul.f32 %v78, %v93
    %v144 = vmul.f32 %v79, %v93
    %v145 = vmul.f32 %v80, %v93
    %v146 = vmul.f32 %v81, %v93
    %v147 = vmul.f32 %v82, %v93
    %v148 = vmul.f32 %v83, %v93
    %v149 = vmul.f32 %v84, %v93
    %v150 = vmul.f32 %v85, %v93
    %v151 = vmul.f32 %v86, %v93
    %v152 = vmul.f32 %v87, %v93
    %v153 = vmul.f32 %v88, %v93
    %v154 = vmul.f32 %v89, %v93
    %v155 = vmul.f32 %v90, %v93
    %v156 = vmul.f32 %v91, %v93
    %v157 = vmul.f32 %v92, %v93
    %158 = vst [vmem:[#allocation6] sm:$0xff] %v94
    %159 = vst [vmem:[#allocation6 + $0x8] sm:$0xff] %v95
    %160 = vst [vmem:[#allocation6 + $0x10] sm:$0xff] %v96
    %161 = vst [vmem:[#allocation6 + $0x18] sm:$0xff] %v97
    %162 = vst [vmem:[#allocation6 + $0x20] sm:$0xff] %v98
    %163 = vst [vmem:[#allocation6 + $0x28] sm:$0xff] %v99
    %164 = vst [vmem:[#allocation6 + $0x30] sm:$0xff] %v100
    %165 = vst [vmem:[#allocation6 + $0x38] sm:$0xff] %v101
    %166 = vst [vmem:[#allocation6 + $0x40] sm:$0xff] %v102
    %167 = vst [vmem:[#allocation6 + $0x48] sm:$0xff] %v103
    %168 = vst [vmem:[#allocation6 + $0x50] sm:$0xff] %v104
    %169 = vst [vmem:[#allocation6 + $0x58] sm:$0xff] %v105
    %170 = vst [vmem:[#allocation6 + $0x60] sm:$0xff] %v106
    %171 = vst [vmem:[#allocation6 + $0x68] sm:$0xff] %v107
    %172 = vst [vmem:[#allocation6 + $0x70] sm:$0xff] %v108
    %173 = vst [vmem:[#allocation6 + $0x78] sm:$0xff] %v109
    %174 = vst [vmem:[#allocation6 + $0x80] sm:$0xff] %v110
    %175 = vst [vmem:[#allocation6 + $0x88] sm:$0xff] %v111
    %176 = vst [vmem:[#allocation6 + $0x90] sm:$0xff] %v112
    %177 = vst [vmem:[#allocation6 + $0x98] sm:$0xff] %v113
    %178 = vst [vmem:[#allocation6 + $0xa0] sm:$0xff] %v114
    %179 = vst [vmem:[#allocation6 + $0xa8] sm:$0xff] %v115
    %180 = vst [vmem:[#allocation6 + $0xb0] sm:$0xff] %v116
    %181 = vst [vmem:[#allocation6 + $0xb8] sm:$0xff] %v117
    %182 = vst [vmem:[#allocation6 + $0xc0] sm:$0xff] %v118
    %183 = vst [vmem:[#allocation6 + $0xc8] sm:$0xff] %v119
    %184 = vst [vmem:[#allocation6 + $0xd0] sm:$0xff] %v120
    %185 = vst [vmem:[#allocation6 + $0xd8] sm:$0xff] %v121
    %186 = vst [vmem:[#allocation6 + $0xe0] sm:$0xff] %v122
    %187 = vst [vmem:[#allocation6 + $0xe8] sm:$0xff] %v123
    %188 = vst [vmem:[#allocation6 + $0xf0] sm:$0xff] %v124
    %189 = vst [vmem:[#allocation6 + $0xf8] sm:$0xff] %v125
    %190 = vst [vmem:[#allocation6 + $0x100] sm:$0xff] %v126
    %191 = vst [vmem:[#allocation6 + $0x108] sm:$0xff] %v127
    %192 = vst [vmem:[#allocation6 + $0x110] sm:$0xff] %v128
    %193 = vst [vmem:[#allocation6 + $0x118] sm:$0xff] %v129
    %194 = vst [vmem:[#allocation6 + $0x120] sm:$0xff] %v130
    %195 = vst [vmem:[#allocation6 + $0x128] sm:$0xff] %v131
    %196 = vst [vmem:[#allocation6 + $0x130] sm:$0xff] %v132
    %197 = vst [vmem:[#allocation6 + $0x138] sm:$0xff] %v133
    %198 = vst [vmem:[#allocation6 + $0x140] sm:$0xff] %v134
    %199 = vst [vmem:[#allocation6 + $0x148] sm:$0xff] %v135
    %200 = vst [vmem:[#allocation6 + $0x150] sm:$0xff] %v136
    %201 = vst [vmem:[#allocation6 + $0x158] sm:$0xff] %v137
    %202 = vst [vmem:[#allocation6 + $0x160] sm:$0xff] %v138
    %203 = vst [vmem:[#allocation6 + $0x168] sm:$0xff] %v139
    %204 = vst [vmem:[#allocation6 + $0x170] sm:$0xff] %v140
    %205 = vst [vmem:[#allocation6 + $0x178] sm:$0xff] %v141
    %206 = vst [vmem:[#allocation6 + $0x180] sm:$0xff] %v142
    %207 = vst [vmem:[#allocation6 + $0x188] sm:$0xff] %v143
    %208 = vst [vmem:[#allocation6 + $0x190] sm:$0xff] %v144
    %209 = vst [vmem:[#allocation6 + $0x198] sm:$0xff] %v145
    %210 = vst [vmem:[#allocation6 + $0x1a0] sm:$0xff] %v146
    %211 = vst [vmem:[#allocation6 + $0x1a8] sm:$0xff] %v147
    %212 = vst [vmem:[#allocation6 + $0x1b0] sm:$0xff] %v148
    %213 = vst [vmem:[#allocation6 + $0x1b8] sm:$0xff] %v149
    %214 = vst [vmem:[#allocation6 + $0x1c0] sm:$0xff] %v150
    %215 = vst [vmem:[#allocation6 + $0x1c8] sm:$0xff] %v151
    %216 = vst [vmem:[#allocation6 + $0x1d0] sm:$0xff] %v152
    %217 = vst [vmem:[#allocation6 + $0x1d8] sm:$0xff] %v153
    %218 = vst [vmem:[#allocation6 + $0x1e0] sm:$0xff] %v154
    %219 = vst [vmem:[#allocation6 + $0x1e8] sm:$0xff] %v155
    %220 = vst [vmem:[#allocation6 + $0x1f0] sm:$0xff] %v156
    %221 = vst [vmem:[#allocation6 + $0x1f8] sm:$0xff] %v157
    // Predicated region
    $region14: #{tpu_custom_call.1} parent=1 // pred_check
      _
    $region15: #{tpu_custom_call.1} parent=1 // pred_check_branch
      %223 = sbr.rel (0) target = $region17
    $region16: #{tpu_custom_call.1} parent=1 // pred_region
      %s225 = ssub.s32 8192, 8192
      %226 = vsyncadd [#allocation5], %s225
      %s227 = sshll.u32 [#allocation6], 4
      %s228 = int_to_ptr.vmem [resolvable:$true] %s227
      %233 = dma.vmem_to_hbm [thread:$0]  %s228, 8192, %s2, [#allocation5], 1024, 1024, 64
    $region17: #{tpu_custom_call.1} parent=1 // pred_fallthru
      _
    // Predicated region
    $region18: #{tpu_custom_call.1} parent=1 // pred_check
      _
    $region19: #{tpu_custom_call.1} parent=1 // pred_check_branch
      %235 = sbr.rel (0) target = $region21
    $region20: #{tpu_custom_call.1} parent=1 // pred_region
      %236 = dma.done [#allocation5], 8192
    $region21: #{tpu_custom_call.1} parent=1 // pred_fallthru
      _
    %237 = vsyncpa [#allocation4], 1
    %238 = vsyncpa [#allocation5], 1

</llo_original>
